<compile_context>
chip_gen: v7x
topology: tpu7x:2x2x1
jax: 0.10.0
libtpu: 0.0.40
codegen_flags: <defaults>
</compile_context>

<pallas_src>
import functools

import jax
import jax.numpy as jnp
from jax.experimental import pallas as pl
from jax.experimental.pallas import tpu as pltpu

STATE_DIM = 4      # CartPole-v1 observation dim
HIDDEN_DIM = 64
ACTION_DIM = 2     # CartPole-v1 action dim
# TODO(synk): kernel is specialized to ACTION_DIM == 2 (softmax == sigmoid of
# the logit difference); a general action_dim would need a softmax epilogue.

# Rows per grid step.  Lane-dense layout: one step touches only
# ~(4+64+2)*tile_b*4 bytes of VMEM, so 2048 is comfortably cheap everywhere.
TILE_B_DEFAULT = 2048


def _round_up(n, m):
    return ((n + m - 1) // m) * m


def policy_kernel(x_ref, w1t_ref, b1_ref, w2d_ref, b2d_ref, out_ref):
    # x_ref:   (STATE_DIM, tile_b)   batch on the lane axis (lane-dense)
    # w1t_ref: (HIDDEN_DIM, STATE_DIM)
    # b1_ref:  (HIDDEN_DIM, 1)
    # w2d_ref: (1, HIDDEN_DIM)       w2[:,1] - w2[:,0]
    # b2d_ref: (1, 1)                b2[1] - b2[0]
    # out_ref: (ACTION_DIM, tile_b)
    x = x_ref[...]
    # fc1 + relu: (64,4) @ (4,tile_b) on the MXU (K=4 is tiny; still cheap),
    # bias broadcast along lanes, relu on the VPU.
    h = jnp.dot(w1t_ref[...], x, preferred_element_type=jnp.float32)
    h = jnp.maximum(h + b1_ref[...], 0.0)                    # (64, tile_b)
    # Folded fc2: logit difference d = (w2[:,1]-w2[:,0])^T h + (b2[1]-b2[0]).
    d = jnp.dot(w2d_ref[...], h, preferred_element_type=jnp.float32)
    d = d + b2d_ref[...]                                      # (1, tile_b)
    # Exact 2-way softmax: p1 = sigmoid(d), p0 = 1 - p1.
    p1 = 1.0 / (1.0 + jnp.exp(-d))
    out_ref[0:1, :] = 1.0 - p1
    out_ref[1:2, :] = p1


@functools.partial(jax.jit, static_argnames=("tile_b",))
def policy_forward(x, w1, b1, w2, b2, *, tile_b=TILE_B_DEFAULT):
    """x: (B, STATE_DIM) f32 -> probs: (B, ACTION_DIM) f32."""
    B = x.shape[0]

    # Lane-dense tiles: tile_b is a multiple of 128.
    b128 = _round_up(max(B, 1), 128)
    tile = min(_round_up(tile_b, 128), b128)
    if b128 >= 2 * 128:
        # Keep the grid >= 2 steps so v7x's two TensorCores both get work.
        tile = min(tile, _round_up((b128 + 1) // 2, 128))
    Bp = _round_up(B, tile)
    grid = (Bp // tile,)

    # Pad batch, put batch on the lane (last) axis.
    if Bp != B:
        x = jnp.pad(x, ((0, Bp - B), (0, 0)))
    x_t = x.T                                                  # (STATE_DIM, Bp)

    # Kernel-side parameter forms.
    w1t = w1.T                                                 # (HIDDEN, STATE)
    b1c = b1.reshape(HIDDEN_DIM, 1)                           # (HIDDEN, 1)
    w2d = (w2[:, 1] - w2[:, 0]).reshape(1, HIDDEN_DIM)        # (1, HIDDEN)
    b2d = (b2[0, 1] - b2[0, 0]).reshape(1, 1)                 # (1, 1)

    flops = 2 * Bp * (STATE_DIM * HIDDEN_DIM + HIDDEN_DIM)
    transcendentals = Bp                                       # one exp / row
    param_bytes = 4 * (STATE_DIM * HIDDEN_DIM + HIDDEN_DIM + HIDDEN_DIM + 1)
    bytes_accessed = 4 * Bp * (STATE_DIM + ACTION_DIM) + param_bytes

    out_t = pl.pallas_call(
        policy_kernel,
        out_shape=jax.ShapeDtypeStruct((ACTION_DIM, Bp), jnp.float32),
        grid=grid,
        in_specs=[
            # x: one lane-dense batch tile per grid step (auto double-buffered).
            pl.BlockSpec((STATE_DIM, tile), lambda i: (0, i)),
            # Parameters: constant block index -> VMEM-resident, DMA'd once.
            pl.BlockSpec((HIDDEN_DIM, STATE_DIM), lambda i: (0, 0)),
            pl.BlockSpec((HIDDEN_DIM, 1), lambda i: (0, 0)),
            pl.BlockSpec((1, HIDDEN_DIM), lambda i: (0, 0)),
            pl.BlockSpec((1, 1), lambda i: (0, 0)),
        ],
        out_specs=pl.BlockSpec((ACTION_DIM, tile), lambda i: (0, i)),
        compiler_params=pltpu.CompilerParams(
            # Independent batch tiles -> shard across v7x's 2 TensorCores.
            dimension_semantics=("parallel",),
            vmem_limit_bytes=32 * 1024 * 1024,
        ),
        cost_estimate=pl.CostEstimate(
            flops=flops,
            transcendentals=transcendentals,
            bytes_accessed=bytes_accessed,
        ),
    )(x_t, w1t, b1c, w2d, b2d)

    # (ACTION_DIM, Bp) -> (B, ACTION_DIM)
    return out_t.T[:B]


def init_params(key):
    """Xavier-normal weights (matches nn.init.xavier_normal_ in the spec),
    PyTorch-default uniform biases.  Stored as (in, out)."""
    # TODO(synk): to reproduce a real PyTorch checkpoint exactly, load its
    # weights (transposed to (in, out)) instead of re-initializing here.
    k1, k2, k3, k4 = jax.random.split(key, 4)

    def xavier_normal(k, fan_in, fan_out):
        std = (2.0 / (fan_in + fan_out)) ** 0.5
        return std * jax.random.normal(k, (fan_in, fan_out), dtype=jnp.float32)

    def bias_init(k, fan_in, fan_out):
        bound = 1.0 / (fan_in ** 0.5)
        return jax.random.uniform(
            k, (1, fan_out), minval=-bound, maxval=bound, dtype=jnp.float32)

    w1 = xavier_normal(k1, STATE_DIM, HIDDEN_DIM)
    b1 = bias_init(k2, STATE_DIM, HIDDEN_DIM)
    w2 = xavier_normal(k3, HIDDEN_DIM, ACTION_DIM)
    b2 = bias_init(k4, HIDDEN_DIM, ACTION_DIM)
    return w1, b1, w2, b2


def reference_forward(x, w1, b1, w2, b2):
    h = jnp.maximum(x @ w1 + b1, 0.0)
    logits = h @ w2 + b2
    return jax.nn.softmax(logits, axis=-1)


def _check(x, params, tile_b=TILE_B_DEFAULT):
    probs = policy_forward(x, *params, tile_b=tile_b)
    probs = jax.block_until_ready(probs)
    ref = reference_forward(x, *params)
    assert probs.shape == (x.shape[0], ACTION_DIM)
    assert jnp.allclose(probs, ref, atol=1e-5, rtol=1e-5), "mismatch vs reference"
    assert jnp.allclose(jnp.sum(probs, axis=-1), 1.0, atol=1e-5)
    return probs


if __name__ == "__main__":
    key = jax.random.PRNGKey(0)
    pkey, xkey1, xkey2 = jax.random.split(key, 3)
    params = init_params(pkey)

    # Small batch (single grid step, tile shrunk to 128 lanes).
    x_small = jax.random.normal(xkey1, (8, STATE_DIM), dtype=jnp.float32)
    _check(x_small, params)

    # Batch exercising padding + the multi-tile grid path
    # (300 rows -> tile=256, padded to 512, grid=(2,)).
    x_med = jax.random.normal(xkey2, (300, STATE_DIM), dtype=jnp.float32)
    _check(x_med, params)

    print("KERNEL_OK")
</pallas_src>

<mosaic_0001>
module attributes {stable_mosaic.version = 11 : i64} {
  func.func @policy_kernel(%arg0: i32, %arg1: memref<4x128xf32, #tpu.memory_space<vmem>>, %arg2: memref<64x4xf32, #tpu.memory_space<vmem>>, %arg3: memref<64x1xf32, #tpu.memory_space<vmem>>, %arg4: memref<1x64xf32, #tpu.memory_space<vmem>>, %arg5: memref<1x1xf32, #tpu.memory_space<vmem>>, %arg6: memref<2x128xf32, #tpu.memory_space<vmem>>) attributes {dimension_semantics = [#tpu.dimension_semantics<parallel>], iteration_bounds = array<i64: 1>, scalar_prefetch = 0 : i64, scratch_operands = 0 : i64, tpu.core_type = #tpu.core_type<tc>, window_params = [{transform_indices = @transform_0, window_bounds = array<i64: 4, 128>}, {pipeline_mode = #tpu.pipeline_mode<synchronous>, transform_indices = @transform_1, window_bounds = array<i64: 64, 4>}, {pipeline_mode = #tpu.pipeline_mode<synchronous>, transform_indices = @transform_2, window_bounds = array<i64: 64, 1>}, {pipeline_mode = #tpu.pipeline_mode<synchronous>, transform_indices = @transform_3, window_bounds = array<i64: 1, 64>}, {pipeline_mode = #tpu.pipeline_mode<synchronous>, transform_indices = @transform_4, window_bounds = array<i64: 1, 1>}, {transform_indices = @transform_5, window_bounds = array<i64: 2, 128>}]} {
    %c0 = arith.constant 0 : index
    %c0_0 = arith.constant 0 : index
    %0 = vector.load %arg1[%c0, %c0_0] : memref<4x128xf32, #tpu.memory_space<vmem>>, vector<4x128xf32>
    %c0_1 = arith.constant 0 : index
    %c0_2 = arith.constant 0 : index
    %1 = vector.load %arg2[%c0_1, %c0_2] : memref<64x4xf32, #tpu.memory_space<vmem>>, vector<64x4xf32>
    %cst = arith.constant dense<0.000000e+00> : vector<64x128xf32>
    %2 = tpu.matmul %1, %0, %cst {dimension_numbers = #tpu.dot_dimension_numbers<[1], [0], [0], [1], [0, 0, 1, 1], [], []>} : vector<64x4xf32>, vector<4x128xf32>, vector<64x128xf32> -> vector<64x128xf32>
    %c0_3 = arith.constant 0 : index
    %c0_4 = arith.constant 0 : index
    %3 = vector.load %arg3[%c0_3, %c0_4] : memref<64x1xf32, #tpu.memory_space<vmem>>, vector<64x1xf32>
    %4 = vector.broadcast %3 : vector<64x1xf32> to vector<64x128xf32>
    %5 = arith.addf %2, %4 : vector<64x128xf32>
    %cst_5 = arith.constant 0.000000e+00 : f32
    %6 = vector.broadcast %cst_5 : f32 to vector<64x128xf32>
    %7 = arith.maximumf %5, %6 : vector<64x128xf32>
    %c0_6 = arith.constant 0 : index
    %c0_7 = arith.constant 0 : index
    %8 = vector.load %arg4[%c0_6, %c0_7] : memref<1x64xf32, #tpu.memory_space<vmem>>, vector<1x64xf32>
    %cst_8 = arith.constant dense<0.000000e+00> : vector<1x128xf32>
    %9 = tpu.matmul %8, %7, %cst_8 {dimension_numbers = #tpu.dot_dimension_numbers<[1], [0], [0], [1], [0, 0, 1, 1], [], []>} : vector<1x64xf32>, vector<64x128xf32>, vector<1x128xf32> -> vector<1x128xf32>
    %c0_9 = arith.constant 0 : index
    %c0_10 = arith.constant 0 : index
    %10 = vector.load %arg5[%c0_9, %c0_10] : memref<1x1xf32, #tpu.memory_space<vmem>>, vector<1x1xf32>
    %11 = vector.broadcast %10 : vector<1x1xf32> to vector<1x128xf32>
    %12 = arith.addf %9, %11 : vector<1x128xf32>
    %cst_11 = arith.constant 0.000000e+00 : f32
    %13 = vector.broadcast %cst_11 : f32 to vector<1x128xf32>
    %14 = arith.subf %13, %12 : vector<1x128xf32>
    %15 = math.exp %14 : vector<1x128xf32>
    %cst_12 = arith.constant 1.000000e+00 : f32
    %16 = vector.broadcast %cst_12 : f32 to vector<1x128xf32>
    %17 = arith.addf %16, %15 : vector<1x128xf32>
    %cst_13 = arith.constant 1.000000e+00 : f32
    %18 = vector.broadcast %cst_13 : f32 to vector<1x128xf32>
    %19 = arith.divf %18, %17 : vector<1x128xf32>
    %cst_14 = arith.constant 1.000000e+00 : f32
    %20 = vector.broadcast %cst_14 : f32 to vector<1x128xf32>
    %21 = arith.subf %20, %19 : vector<1x128xf32>
    %c0_15 = arith.constant 0 : index
    %c0_16 = arith.constant 0 : index
    %22 = vector.load %arg6[%c0_15, %c0_16] : memref<2x128xf32, #tpu.memory_space<vmem>>, vector<1x128xf32>
    tpu.vector_store %arg6[%c0_15, %c0_16], %21 {strides = array<i32>} : memref<2x128xf32, #tpu.memory_space<vmem>>, vector<1x128xf32>,
    %c1 = arith.constant 1 : index
    %c0_17 = arith.constant 0 : index
    %23 = vector.load %arg6[%c1, %c0_17] : memref<2x128xf32, #tpu.memory_space<vmem>>, vector<1x128xf32>
    tpu.vector_store %arg6[%c1, %c0_17], %19 {strides = array<i32>} : memref<2x128xf32, #tpu.memory_space<vmem>>, vector<1x128xf32>,
    return
  }
  func.func @transform_0(%arg0: i32) -> (i32, i32) {
    %c0_i32 = arith.constant 0 : i32
    %c0_i32_0 = arith.constant 0 : i32
    return %c0_i32, %arg0 : i32, i32
  }
  func.func @transform_1(%arg0: i32) -> (i32, i32) {
    %c0_i32 = arith.constant 0 : i32
    %c0_i32_0 = arith.constant 0 : i32
    %c0_i32_1 = arith.constant 0 : i32
    return %c0_i32, %c0_i32_0 : i32, i32
  }
  func.func @transform_2(%arg0: i32) -> (i32, i32) {
    %c0_i32 = arith.constant 0 : i32
    %c0_i32_0 = arith.constant 0 : i32
    %c0_i32_1 = arith.constant 0 : i32
    return %c0_i32, %c0_i32_0 : i32, i32
  }
  func.func @transform_3(%arg0: i32) -> (i32, i32) {
    %c0_i32 = arith.constant 0 : i32
    %c0_i32_0 = arith.constant 0 : i32
    %c0_i32_1 = arith.constant 0 : i32
    return %c0_i32, %c0_i32_0 : i32, i32
  }
  func.func @transform_4(%arg0: i32) -> (i32, i32) {
    %c0_i32 = arith.constant 0 : i32
    %c0_i32_0 = arith.constant 0 : i32
    %c0_i32_1 = arith.constant 0 : i32
    return %c0_i32, %c0_i32_0 : i32, i32
  }
  func.func @transform_5(%arg0: i32) -> (i32, i32) {
    %c0_i32 = arith.constant 0 : i32
    %c0_i32_0 = arith.constant 0 : i32
    return %c0_i32, %arg0 : i32, i32
  }
}

</mosaic_0001>

<llo_original>
// kernel: policy_forward.1
$region0: #{policy_forward.1}
  #allocation0 [shape = 'u32[]', space=smem, size = 0x4, offset = 0x4, fixed_abs, tag = 'smem constant byte address 0x4 - core index']
  #allocation1 [shape = 'u32[144,128]{1,0:T(1,128)}', space=vmem, size = 0x12000, scoped, tag = 'internal scratch']
  #allocation2 [shape = 'f32[1,1]{1,0:T(1,128)S(1)}', space=vmem, size = 0x200, scoped, tag = 'scoped memory for policy_forward.1']
  %s0 = inlined_call_operand.vmem [shape: f32[4,128], index: 0, kind: input, shape index: {}]
  %s1 = inlined_call_operand.vmem [shape: f32[64,4], index: 1, kind: input, shape index: {}]
  %s2 = inlined_call_operand.vmem [shape: f32[64,1], index: 2, kind: input, shape index: {}]
  %s3 = inlined_call_operand.vmem [shape: f32[1,64], index: 3, kind: input, shape index: {}]
  %s4 = inlined_call_operand.<no memory space> [shape: f32[1,1], index: 4, kind: input, shape index: {}]
  %s5 = inlined_call_operand.hbm [shape: f32[2,128], index: 5, kind: output, shape index: {}]
  %s6 = sld [smem:[#allocation0]]
  $region30: #{policy_forward.1} parent=0
    _
  %s8 = ssub.s32 1, %s6
  %s9 = scalar_select 0, %s8, %s6
  %v10 = vstv %s4
  %11 = vst [vmem:[#allocation2] sm:$0x1] %v10
  $region1: #{policy_forward.1} parent=0
    #allocation3 [shape = 'u8[1024]{0}', space=vmem, size = 0x400, scoped, tag = 'output window, operand 0, single buffered']
    #allocation4 [shape = 's32[1]{0}', space=sflag, size = 0x4, scoped, tag = 'scoped memory for policy_forward.1']
    %12 = vsyncpa [#allocation4], 0
    // Predicated region
    $region2: #{policy_forward.1} parent=1 // pred_check
      _
    $region3: #{policy_forward.1} parent=1 // pred_check_branch
      %14 = sbr.rel (0) target = $region5
    $region4: #{policy_forward.1} parent=1 // pred_region
      _
    $region5: #{policy_forward.1} parent=1 // pred_fallthru
      _
    // Predicated region
    $region6: #{policy_forward.1} parent=1 // pred_check
      _
    $region7: #{policy_forward.1} parent=1 // pred_check_branch
      %16 = sbr.rel (0) target = $region9
    $region8: #{policy_forward.1} parent=1 // pred_region
      _
    $region9: #{policy_forward.1} parent=1 // pred_fallthru
      _
    // Predicated region
    $region10: #{policy_forward.1} parent=1 // pred_check
      _
    $region11: #{policy_forward.1} parent=1 // pred_check_branch
      %18 = sbr.rel (0) target = $region13
    $region12: #{policy_forward.1} parent=1 // pred_region
      _
    $region13: #{policy_forward.1} parent=1 // pred_fallthru
      _
    // Predicated region
    $region14: #{policy_forward.1} parent=1 // pred_check
      _
    $region15: #{policy_forward.1} parent=1 // pred_check_branch
      %20 = sbr.rel (0) target = $region17
    $region16: #{policy_forward.1} parent=1 // pred_region
      _
    $region17: #{policy_forward.1} parent=1 // pred_fallthru
      _
    // Predicated region
    $region18: #{policy_forward.1} parent=1 // pred_check
      _
    $region19: #{policy_forward.1} parent=1 // pred_check_branch
      %22 = sbr.rel (0) target = $region21
    $region20: #{policy_forward.1} parent=1 // pred_region
      _
    $region21: #{policy_forward.1} parent=1 // pred_fallthru
      _
    %v23 = vld [vmem:[%s0] sm:$0xf]
    %v24 = vld [vmem:[%s1] sm:$0xff]
    %v25 = vld [vmem:[%s1 + $0x8] sm:$0xff]
    %v26 = vld [vmem:[%s1 + $0x10] sm:$0xff]
    %v27 = vld [vmem:[%s1 + $0x18] sm:$0xff]
    %v28 = vld [vmem:[%s1 + $0x20] sm:$0xff]
    %v29 = vld [vmem:[%s1 + $0x28] sm:$0xff]
    %v30 = vld [vmem:[%s1 + $0x30] sm:$0xff]
    %v31 = vld [vmem:[%s1 + $0x38] sm:$0xff]
    %v32 = vld [vmem:[%s2] sm:$0xff]
    %v33 = vld [vmem:[%s2 + $0x8] sm:$0xff]
    %v34 = vld [vmem:[%s2 + $0x10] sm:$0xff]
    %v35 = vld [vmem:[%s2 + $0x18] sm:$0xff]
    %v36 = vld [vmem:[%s2 + $0x20] sm:$0xff]
    %v37 = vld [vmem:[%s2 + $0x28] sm:$0xff]
    %v38 = vld [vmem:[%s2 + $0x30] sm:$0xff]
    %v39 = vld [vmem:[%s2 + $0x38] sm:$0xff]
    %41 = vset.pattern.permute.xlu0 0
    %42 = vperm.xlu0 %41, %v32
    %v43 = vpop.permute.xlu0 %42
    %46 = vset.pattern.permute.xlu0 0
    %47 = vperm.xlu0 %46, %v33
    %v48 = vpop.permute.xlu0 %47
    %51 = vset.pattern.permute.xlu0 0
    %52 = vperm.xlu0 %51, %v34
    %v53 = vpop.permute.xlu0 %52
    %56 = vset.pattern.permute.xlu0 0
    %57 = vperm.xlu0 %56, %v35
    %v58 = vpop.permute.xlu0 %57
    %61 = vset.pattern.permute.xlu0 0
    %62 = vperm.xlu0 %61, %v36
    %v63 = vpop.permute.xlu0 %62
    %66 = vset.pattern.permute.xlu0 0
    %67 = vperm.xlu0 %66, %v37
    %v68 = vpop.permute.xlu0 %67
    %71 = vset.pattern.permute.xlu0 0
    %72 = vperm.xlu0 %71, %v38
    %v73 = vpop.permute.xlu0 %72
    %76 = vset.pattern.permute.xlu0 0
    %77 = vperm.xlu0 %76, %v39
    %v78 = vpop.permute.xlu0 %77
    %vm80 = vcmask 31744
    %v82 = vsel %vm80, %v24, 0
    %v85 = vsel %vm80, %v25, 0
    %v88 = vsel %vm80, %v26, 0
    %v91 = vsel %vm80, %v27, 0
    %v94 = vsel %vm80, %v28, 0
    %v97 = vsel %vm80, %v29, 0
    %v100 = vsel %vm80, %v30, 0
    %v103 = vsel %vm80, %v31, 0
    %vm105 = vcmask 1043456
    %v107 = vsel %vm105, %v23, 0
    %109 = vmatprep.subr.mxu0 0.0
    %110 = vmatpush1.msra.mxu0 %v107
    %111 = vmatprep.subr.mxu0 0.0
    %112 = vmatpush1.msra.mxu0 0.0
    %113 = vmatprep.subr.mxu0 0.0
    %114 = vmatpush1.msra.mxu0 0.0
    %115 = vmatprep.subr.mxu0 0.0
    %116 = vmatpush1.msra.mxu0 0.0
    %117 = vmatprep.subr.mxu0 0.0
    %118 = vmatpush1.msra.mxu0 0.0
    %119 = vmatprep.subr.mxu0 0.0
    %120 = vmatpush1.msra.mxu0 0.0
    %121 = vmatprep.subr.mxu0 0.0
    %122 = vmatpush1.msra.mxu0 0.0
    %123 = vmatprep.subr.mxu0 0.0
    %124 = vmatpush1.msra.mxu0 0.0
    %125 = vmatprep.subr.mxu0 0.0
    %126 = vmatpush1.msra.mxu0 0.0
    %127 = vmatprep.subr.mxu0 0.0
    %128 = vmatpush1.msra.mxu0 0.0
    %129 = vmatprep.subr.mxu0 0.0
    %130 = vmatpush1.msra.mxu0 0.0
    %131 = vmatprep.subr.mxu0 0.0
    %132 = vmatpush1.msra.mxu0 0.0
    %133 = vmatprep.subr.mxu0 0.0
    %134 = vmatpush1.msra.mxu0 0.0
    %135 = vmatprep.subr.mxu0 0.0
    %136 = vmatpush1.msra.mxu0 0.0
    %137 = vmatprep.subr.mxu0 0.0
    %138 = vmatpush1.msra.mxu0 0.0
    %139 = vmatprep.subr.mxu0 0.0
    %140 = vmatpush1.msra.mxu0 0.0
    %141 = vmatprep.subr.mxu0 0.0
    %142 = vmatpush1.msra.mxu0 0.0
    %143 = vmatprep.subr.mxu0 0.0
    %144 = vmatpush1.msra.mxu0 0.0
    %145 = vmatprep.subr.mxu0 0.0
    %146 = vmatpush1.msra.mxu0 0.0
    %147 = vmatprep.subr.mxu0 0.0
    %148 = vmatpush1.msra.mxu0 0.0
    %149 = vmatprep.subr.mxu0 0.0
    %150 = vmatpush1.msra.mxu0 0.0
    %151 = vmatprep.subr.mxu0 0.0
    %152 = vmatpush1.msra.mxu0 0.0
    %153 = vmatprep.subr.mxu0 0.0
    %154 = vmatpush1.msra.mxu0 0.0
    %155 = vmatprep.subr.mxu0 0.0
    %156 = vmatpush1.msra.mxu0 0.0
    %157 = vmatprep.subr.mxu0 0.0
    %158 = vmatpush1.msra.mxu0 0.0
    %159 = vmatprep.subr.mxu0 0.0
    %160 = vmatpush1.msra.mxu0 0.0
    %161 = vmatprep.subr.mxu0 0.0
    %162 = vmatpush1.msra.mxu0 0.0
    %163 = vmatprep.subr.mxu0 0.0
    %164 = vmatpush1.msra.mxu0 0.0
    %165 = vmatprep.subr.mxu0 0.0
    %166 = vmatpush1.msra.mxu0 0.0
    %167 = vmatprep.subr.mxu0 0.0
    %168 = vmatpush1.msra.mxu0 0.0
    %169 = vmatprep.subr.mxu0 0.0
    %170 = vmatpush1.msra.mxu0 0.0
    %171 = vmatprep.subr.mxu0 0.0
    %172 = vmatpush1.msra.mxu0 0.0
    %173 = vmatprep.mubr.f32.mxu0 0.0
    %174 = vmatmul.mubr.f32.gmra.mrb[0].mxu0 %v82
    %v175 = vpop.f32.mrb[0].mxu0
    %v176 = vadd.f32 %v43, %v175
    %v177 = vpop.f32.mrb[0].mxu0
    %178 = vmatprep.mubr.f32.mxu0 0.0
    %179 = vmatmul.mubr.f32.gmra.mrb[0].mxu0 %v85
    %v180 = vpop.f32.mrb[0].mxu0
    %v181 = vadd.f32 %v48, %v180
    %v182 = vpop.f32.mrb[0].mxu0
    %183 = vmatprep.mubr.f32.mxu0 0.0
    %184 = vmatmul.mubr.f32.gmra.mrb[0].mxu0 %v88
    %v185 = vpop.f32.mrb[0].mxu0
    %v186 = vadd.f32 %v53, %v185
    %v187 = vpop.f32.mrb[0].mxu0
    %188 = vmatprep.mubr.f32.mxu0 0.0
    %189 = vmatmul.mubr.f32.gmra.mrb[0].mxu0 %v91
    %v190 = vpop.f32.mrb[0].mxu0
    %v191 = vadd.f32 %v58, %v190
    %v192 = vpop.f32.mrb[0].mxu0
    %193 = vmatprep.mubr.f32.mxu0 0.0
    %194 = vmatmul.mubr.f32.gmra.mrb[0].mxu0 %v94
    %v195 = vpop.f32.mrb[0].mxu0
    %v196 = vadd.f32 %v63, %v195
    %v197 = vpop.f32.mrb[0].mxu0
    %198 = vmatprep.mubr.f32.mxu0 0.0
    %199 = vmatmul.mubr.f32.gmra.mrb[0].mxu0 %v97
    %v200 = vpop.f32.mrb[0].mxu0
    %v201 = vadd.f32 %v68, %v200
    %v202 = vpop.f32.mrb[0].mxu0
    %203 = vmatprep.mubr.f32.mxu0 0.0
    %204 = vmatmul.mubr.f32.gmra.mrb[0].mxu0 %v100
    %v205 = vpop.f32.mrb[0].mxu0
    %v206 = vadd.f32 %v73, %v205
    %v207 = vpop.f32.mrb[0].mxu0
    %208 = vmatprep.mubr.f32.mxu0 0.0
    %209 = vmatmul.mubr.f32.gmra.mrb[0].mxu0 %v103
    %v210 = vpop.f32.mrb[0].mxu0
    %v211 = vadd.f32 %v78, %v210
    %v212 = vpop.f32.mrb[0].mxu0
    %213 = vdwg.mxu0
    %v214 = vmax.f32 %v176, 0.0
    %v215 = vmax.f32 %v181, 0.0
    %v216 = vmax.f32 %v186, 0.0
    %v217 = vmax.f32 %v191, 0.0
    %v218 = vmax.f32 %v196, 0.0
    %v219 = vmax.f32 %v201, 0.0
    %v220 = vmax.f32 %v206, 0.0
    %v221 = vmax.f32 %v211, 0.0
    %v222 = vld [vmem:[%s3] sm:$0x1]
    %v223 = vld [vmem:[#allocation2] sm:$0x1]
    %225 = vset.pattern.permute.xlu0 0
    %226 = vperm.xlu0 %225, %v223
    %v227 = vpop.permute.xlu0 %226
    %v229 = vlaneseq
    %v230 = vshrl.u32 %v229, 7
    %v231 = vsub.s32 0, %v230
    %v232 = vrot.slane %v227, %v231
    %vm233 = vcmask 523264
    %v235 = vsel %vm233, %v222, 0
    %237 = vmatprep.subr.mxu0 0.0
    %238 = vmatpush1.msra.mxu0 %v214
    %239 = vmatprep.subr.mxu0 0.0
    %240 = vmatpush1.msra.mxu0 %v215
    %241 = vmatprep.subr.mxu0 0.0
    %242 = vmatpush1.msra.mxu0 %v216
    %243 = vmatprep.subr.mxu0 0.0
    %244 = vmatpush1.msra.mxu0 %v217
    %245 = vmatprep.subr.mxu0 0.0
    %246 = vmatpush1.msra.mxu0 %v218
    %247 = vmatprep.subr.mxu0 0.0
    %248 = vmatpush1.msra.mxu0 %v219
    %249 = vmatprep.subr.mxu0 0.0
    %250 = vmatpush1.msra.mxu0 %v220
    %251 = vmatprep.subr.mxu0 0.0
    %252 = vmatpush1.msra.mxu0 %v221
    %253 = vmatprep.subr.mxu0 0.0
    %254 = vmatpush1.msra.mxu0 0.0
    %255 = vmatprep.subr.mxu0 0.0
    %256 = vmatpush1.msra.mxu0 0.0
    %257 = vmatprep.subr.mxu0 0.0
    %258 = vmatpush1.msra.mxu0 0.0
    %259 = vmatprep.subr.mxu0 0.0
    %260 = vmatpush1.msra.mxu0 0.0
    %261 = vmatprep.subr.mxu0 0.0
    %262 = vmatpush1.msra.mxu0 0.0
    %263 = vmatprep.subr.mxu0 0.0
    %264 = vmatpush1.msra.mxu0 0.0
    %265 = vmatprep.subr.mxu0 0.0
    %266 = vmatpush1.msra.mxu0 0.0
    %267 = vmatprep.subr.mxu0 0.0
    %268 = vmatpush1.msra.mxu0 0.0
    %269 = vmatprep.subr.mxu0 0.0
    %270 = vmatpush1.msra.mxu0 0.0
    %271 = vmatprep.subr.mxu0 0.0
    %272 = vmatpush1.msra.mxu0 0.0
    %273 = vmatprep.subr.mxu0 0.0
    %274 = vmatpush1.msra.mxu0 0.0
    %275 = vmatprep.subr.mxu0 0.0
    %276 = vmatpush1.msra.mxu0 0.0
    %277 = vmatprep.subr.mxu0 0.0
    %278 = vmatpush1.msra.mxu0 0.0
    %279 = vmatprep.subr.mxu0 0.0
    %280 = vmatpush1.msra.mxu0 0.0
    %281 = vmatprep.subr.mxu0 0.0
    %282 = vmatpush1.msra.mxu0 0.0
    %283 = vmatprep.subr.mxu0 0.0
    %284 = vmatpush1.msra.mxu0 0.0
    %285 = vmatprep.subr.mxu0 0.0
    %286 = vmatpush1.msra.mxu0 0.0
    %287 = vmatprep.subr.mxu0 0.0
    %288 = vmatpush1.msra.mxu0 0.0
    %289 = vmatprep.subr.mxu0 0.0
    %290 = vmatpush1.msra.mxu0 0.0
    %291 = vmatprep.subr.mxu0 0.0
    %292 = vmatpush1.msra.mxu0 0.0
    %293 = vmatprep.subr.mxu0 0.0
    %294 = vmatpush1.msra.mxu0 0.0
    %295 = vmatprep.subr.mxu0 0.0
    %296 = vmatpush1.msra.mxu0 0.0
    %297 = vmatprep.subr.mxu0 0.0
    %298 = vmatpush1.msra.mxu0 0.0
    %299 = vmatprep.subr.mxu0 0.0
    %300 = vmatpush1.msra.mxu0 0.0
    %301 = vmatprep.mubr.f32.mxu0 0.0
    %302 = vmatmul.mubr.f32.gmra.mrb[0].mxu0 %v235
    %v303 = vpop.f32.mrb[0].mxu0
    %v304 = vadd.f32 %v232, %v303
    %v305 = vpop.f32.mrb[0].mxu0
    %306 = vdwg.mxu0
    %v307 = vsub.f32 0.0, %v304
    %v308 = vmul.f32 %v307, 1.442695
    %v309 = vpow.pop %v308
    %v310 = vadd.f32 %v309, 1.0
    %v311 = vrcp.pop %v310
    %v312 = vmul.f32 1.0, %v311
    %v313 = vsub.f32 1.0, %v312
    %314 = vst [vmem:[#allocation3] sm:$0x1] %v313
    %315 = vst [vmem:[#allocation3 + $0x1] sm:$0x1] %v312
    // Predicated region
    $region22: #{policy_forward.1} parent=1 // pred_check
      _
    $region23: #{policy_forward.1} parent=1 // pred_check_branch
      %317 = sbr.rel (0) target = $region25
    $region24: #{policy_forward.1} parent=1 // pred_region
      %s319 = ssub.s32 32, 32
      %320 = vsyncadd [#allocation4], %s319
      %s322 = sshll.u32 [#allocation3], 4
      %s323 = int_to_ptr.vmem [resolvable:$true] %s322
      %325 = dma.vmem_to_hbm [thread:$0]  %s323, 32, %s5, [#allocation4]
    $region25: #{policy_forward.1} parent=1 // pred_fallthru
      _
    // Predicated region
    $region26: #{policy_forward.1} parent=1 // pred_check
      _
    $region27: #{policy_forward.1} parent=1 // pred_check_branch
      %327 = sbr.rel (0) target = $region29
    $region28: #{policy_forward.1} parent=1 // pred_region
      %328 = dma.done [#allocation4], 32
    $region29: #{policy_forward.1} parent=1 // pred_fallthru
      _
    %329 = vsyncpa [#allocation4], 1

</llo_original>
